<compile_context>
chip_gen: v6e
topology: v6e:2x2x1
jax: 0.10.0
libtpu: 0.0.40
codegen_flags: <defaults>
</compile_context>

<pallas_src>
import jax
import jax.numpy as jnp
from jax.experimental import pallas as pl
from jax.experimental.pallas import tpu as pltpu


def _round_up(x, m):
    return ((x + m - 1) // m) * m


def _make_kernel(compute_dtype):
    def kernel(x_ref, w1_ref, b1_ref, w2_ref, b2_ref, o_ref):
        """One (C, TL) tile of the fused ResNet block.

        x_ref  : (C, TL)  input tile (residual source), length on lanes
        w1_ref : (C, C)   conv1 weight (C_out, C_in), compute dtype
        b1_ref : (C, 1)   conv1 bias, f32
        w2_ref : (C, C)   conv2 weight, compute dtype
        b2_ref : (C, 1)   conv2 bias, f32
        o_ref  : (C, TL)  output tile
        """
        x_res = x_ref[...].astype(jnp.float32)       # residual path stays f32
        x_mm = x_ref[...].astype(compute_dtype)      # MXU path

        # conv1 (1x1): (C, C) @ (C, TL) -> (C, TL), f32 accumulation on MXU.
        h = jnp.dot(w1_ref[...], x_mm, preferred_element_type=jnp.float32)
        h = jnp.maximum(h + b1_ref[...], 0.0)        # bias + ReLU in f32 (VPU)

        # conv2 (1x1)
        y = jnp.dot(w2_ref[...], h.astype(compute_dtype),
                    preferred_element_type=jnp.float32)
        y = y + b2_ref[...]

        # residual add + ReLU, lane-dense store
        o_ref[...] = jnp.maximum(x_res + y, 0.0).astype(o_ref.dtype)

    return kernel


def _vmem_budget():
    """(physical VMEM capacity, working budget) in bytes, generation-aware."""
    try:
        cap = int(pltpu.get_tpu_info().vmem_capacity_bytes)
    except Exception:
        cap = 64 * 1024 * 1024            # conservative: assume v7x-sized VMEM
    return cap, int(0.6 * cap)            # ~38 MiB on v7x, ~76 MiB on v5e/v6e


def _choose_tiling(B, L, C, in_itemsize, out_itemsize, act_budget,
                   target_tile_bytes):
    """Pick lane-tile length TL (multiple of 128) and padded length.

    Returns (TL, L_padded, num_length_tiles).
    """
    bytes_per_lane = C * (in_itemsize + out_itemsize)
    # Double-buffered x + out tiles must fit the activation VMEM budget.
    tl_budget = max(128, (act_budget // (2 * bytes_per_lane)) // 128 * 128)
    # ~target_tile_bytes of x per tile: big, lane-dense DMAs, few grid steps.
    tl_target = max(128, (target_tile_bytes // (C * in_itemsize)) // 128 * 128)
    tl = min(tl_budget, tl_target)

    if B == 1 and L >= 256:
        # v7x has 2 TensorCores: never collapse to a single grid step.
        tl = min(tl, max(128, (L // 2) // 128 * 128))

    if L <= tl:
        return L, L, 1                    # full-extent block: legal, no padding

    l_pad = _round_up(L, tl)
    return tl, l_pad, l_pad // tl


def resnet_block1d(x_ncl, w1, b1, w2, b2, *, compute_dtype=jnp.bfloat16,
                   out_dtype=None, alias_input=False,
                   target_tile_bytes=2 * 1024 * 1024):
    """Fused ResNetBlock1d forward.

    x_ncl : (B, C, L) as in PyTorch Conv1d (NCL layout, unchanged on output).
    w1, w2: (C_out, C_in) (kernel_size=1 squeezed).  b1, b2: (C,).
    compute_dtype : dtype fed to the MXU (accumulation is always f32).
    out_dtype     : output dtype (default: x dtype); bf16 halves store traffic.
    alias_input   : reuse x's HBM buffer for the output (production option;
                    donates x, so off by default for the demo/ref-check).
    """
    B, C, L = x_ncl.shape
    out_dtype = x_ncl.dtype if out_dtype is None else jnp.dtype(out_dtype)
    in_itemsize = jnp.dtype(x_ncl.dtype).itemsize
    out_itemsize = jnp.dtype(out_dtype).itemsize
    w_itemsize = jnp.dtype(compute_dtype).itemsize

    vmem_capacity, vmem_budget = _vmem_budget()

    # Single-buffered weights + (8,128)-padded f32 biases.
    w_fp = 2 * C * C * w_itemsize + 2 * _round_up(C, 8) * 128 * 4
    act_budget = max(vmem_budget - w_fp - (1 << 20),
                     4 * C * 128 * (in_itemsize + out_itemsize))

    TL, L_pad, n_l = _choose_tiling(B, L, C, in_itemsize, out_itemsize,
                                    act_budget, target_tile_bytes)
    grid = (B, n_l)

    x_in = x_ncl
    if L_pad != L:
        # Pad L so every tile is lane-dense and VMEM-bounded; sliced off below.
        x_in = jnp.pad(x_ncl, ((0, 0), (0, 0), (0, L_pad - L)))

    w1c = w1.astype(compute_dtype)
    w2c = w2.astype(compute_dtype)
    b1r = b1.reshape(C, 1).astype(jnp.float32)
    b2r = b2.reshape(C, 1).astype(jnp.float32)

    act_fp = 2 * C * TL * (in_itemsize + out_itemsize)  # 2x-buffered x & out

    # Roofline hint for XLA: two matmuls + elementwise; 1 read + 1 write of x.
    flops = 2 * (2 * B * L * C * C) + 4 * B * L * C
    bytes_accessed = (B * C * L * (in_itemsize + out_itemsize)
                      + 2 * C * C * w_itemsize + 2 * C * 4)

    kernel = _make_kernel(compute_dtype)
    alias = {0: 0} if (alias_input and out_dtype == x_in.dtype) else {}

    def build(single_buffer_weights):
        w_kw = ({"pipeline_mode": pl.Buffered(1)}
                if single_buffer_weights else {})
        weight_fp = w_fp if single_buffer_weights else 2 * w_fp
        need = int(1.25 * (act_fp + weight_fp)) + (2 << 20)
        vmem_limit = min(max(need, 16 << 20), vmem_budget)
        vmem_limit = min(max(vmem_limit, need), vmem_capacity)
        return pl.pallas_call(
            kernel,
            out_shape=jax.ShapeDtypeStruct((B, C, L_pad), out_dtype),
            grid_spec=pltpu.PrefetchScalarGridSpec(
                num_scalar_prefetch=0,
                grid=grid,
                in_specs=[
                    # x: (B, C, L) tiled as (squeezed batch, all C, TL lanes).
                    pl.BlockSpec((pl.Squeezed(), C, TL),
                                 lambda b, l: (b, 0, l)),
                    pl.BlockSpec((C, C), lambda b, l: (0, 0), **w_kw),  # W1
                    pl.BlockSpec((C, 1), lambda b, l: (0, 0), **w_kw),  # b1
                    pl.BlockSpec((C, C), lambda b, l: (0, 0), **w_kw),  # W2
                    pl.BlockSpec((C, 1), lambda b, l: (0, 0), **w_kw),  # b2
                ],
                out_specs=pl.BlockSpec((pl.Squeezed(), C, TL),
                                       lambda b, l: (b, 0, l)),
            ),
            compiler_params=pltpu.CompilerParams(
                dimension_semantics=("parallel", "parallel"),
                vmem_limit_bytes=int(vmem_limit),
            ),
            cost_estimate=pl.CostEstimate(
                flops=flops, transcendentals=0, bytes_accessed=bytes_accessed),
            input_output_aliases=alias,
        )

    try:
        out = build(True)(x_in, w1c, b1r, w2c, b2r)
    except Exception:
        # Fallback if this Pallas build rejects pipeline_mode=Buffered(1):
        # default double-buffered weights (only costs extra VMEM).
        out = build(False)(x_in, w1c, b1r, w2c, b2r)

    if L_pad != L:
        out = out[:, :, :L]
    return out


def reference_jax(x_ncl, w1, b1, w2, b2):
    """Pure-JAX reference matching PyTorch semantics (NCL, 1x1 convs, ReLU)."""
    def conv1x1(x, w, b):
        return jnp.einsum("oc,bcl->bol", w, x) + b[None, :, None]

    old_x = x_ncl
    h = jax.nn.relu(conv1x1(x_ncl, w1, b1))
    y = conv1x1(h, w2, b2)
    return jax.nn.relu(old_x + y)


if __name__ == "__main__":
    # Small shapes consistent with the module: batch=2, nfilters=32, length=64.
    B, C, L = 2, 32, 64
    key = jax.random.PRNGKey(0)
    kx, kw1, kb1, kw2, kb2 = jax.random.split(key, 5)

    x = jax.random.normal(kx, (B, C, L), dtype=jnp.float32)
    # Conv1d(nfilters, nfilters, 1).weight is (C_out, C_in, 1); k dim squeezed.
    w1 = jax.random.normal(kw1, (C, C), dtype=jnp.float32) * 0.1
    b1 = jax.random.normal(kb1, (C,), dtype=jnp.float32) * 0.1
    w2 = jax.random.normal(kw2, (C, C), dtype=jnp.float32) * 0.1
    b2 = jax.random.normal(kb2, (C,), dtype=jnp.float32) * 0.1

    ref = reference_jax(x, w1, b1, w2, b2)

    # f32 MXU path: exact match vs reference.
    out_f32 = jax.block_until_ready(
        resnet_block1d(x, w1, b1, w2, b2, compute_dtype=jnp.float32))
    assert out_f32.shape == (B, C, L)
    assert jnp.allclose(out_f32, ref, atol=1e-5, rtol=1e-5), "f32 path mismatch"

    # Default path: bf16 MXU (native on v6e/v7x), f32 accum/bias/residual/ReLU.
    out_def = jax.block_until_ready(resnet_block1d(x, w1, b1, w2, b2))
    assert out_def.shape == (B, C, L)
    assert jnp.allclose(out_def, ref, atol=5e-2, rtol=5e-2), "bf16 path mismatch"

    # Reduced-HBM-traffic variant: bf16 output.
    out_bf16 = jax.block_until_ready(
        resnet_block1d(x, w1, b1, w2, b2, out_dtype=jnp.bfloat16))
    assert out_bf16.shape == (B, C, L)
    assert jnp.allclose(out_bf16.astype(jnp.float32), ref,
                        atol=5e-2, rtol=5e-2), "bf16-output path mismatch"

    # Padded / multi-tile path (B=1, non-multiple-of-128 L): exercises wrapper
    # padding, >=2 length tiles, and the tail slice.
    B2, L2 = 1, 300
    kx2 = jax.random.split(key, 6)[5]
    x2 = jax.random.normal(kx2, (B2, C, L2), dtype=jnp.float32)
    ref2 = reference_jax(x2, w1, b1, w2, b2)
    out2 = jax.block_until_ready(
        resnet_block1d(x2, w1, b1, w2, b2, compute_dtype=jnp.float32))
    assert out2.shape == (B2, C, L2)
    assert jnp.allclose(out2, ref2, atol=1e-5, rtol=1e-5), "padded path mismatch"

    print("KERNEL_OK")
</pallas_src>

<mosaic_0001>
module attributes {stable_mosaic.version = 11 : i64} {
  func.func @kernel(%arg0: i32, %arg1: i32, %arg2: memref<1x32x64xf32, #tpu.memory_space<vmem>>, %arg3: memref<32x32xf32, #tpu.memory_space<vmem>>, %arg4: memref<32x1xf32, #tpu.memory_space<vmem>>, %arg5: memref<32x32xf32, #tpu.memory_space<vmem>>, %arg6: memref<32x1xf32, #tpu.memory_space<vmem>>, %arg7: memref<1x32x64xf32, #tpu.memory_space<vmem>>) attributes {dimension_semantics = [#tpu.dimension_semantics<parallel>, #tpu.dimension_semantics<parallel>], iteration_bounds = array<i64: 2, 1>, scalar_prefetch = 0 : i64, scratch_operands = 0 : i64, tpu.core_type = #tpu.core_type<tc>, window_params = [{transform_indices = @transform_0, window_bounds = array<i64: 1, 32, 64>}, {pipeline_mode = #tpu.pipeline_mode<synchronous>, transform_indices = @transform_1, window_bounds = array<i64: 32, 32>}, {pipeline_mode = #tpu.pipeline_mode<synchronous>, transform_indices = @transform_2, window_bounds = array<i64: 32, 1>}, {pipeline_mode = #tpu.pipeline_mode<synchronous>, transform_indices = @transform_3, window_bounds = array<i64: 32, 32>}, {pipeline_mode = #tpu.pipeline_mode<synchronous>, transform_indices = @transform_4, window_bounds = array<i64: 32, 1>}, {transform_indices = @transform_5, window_bounds = array<i64: 1, 32, 64>}]} {
    %c0 = arith.constant 0 : index
    %c0_0 = arith.constant 0 : index
    %c0_1 = arith.constant 0 : index
    %0 = vector.load %arg2[%c0, %c0_0, %c0_1] : memref<1x32x64xf32, #tpu.memory_space<vmem>>, vector<1x32x64xf32>
    %1 = vector.shape_cast %0 : vector<1x32x64xf32> to vector<32x64xf32>
    %c0_2 = arith.constant 0 : index
    %c0_3 = arith.constant 0 : index
    %c0_4 = arith.constant 0 : index
    %2 = vector.load %arg2[%c0_2, %c0_3, %c0_4] : memref<1x32x64xf32, #tpu.memory_space<vmem>>, vector<1x32x64xf32>
    %3 = vector.shape_cast %2 : vector<1x32x64xf32> to vector<32x64xf32>
    %c0_5 = arith.constant 0 : index
    %c0_6 = arith.constant 0 : index
    %4 = vector.load %arg3[%c0_5, %c0_6] : memref<32x32xf32, #tpu.memory_space<vmem>>, vector<32x32xf32>
    %cst = arith.constant dense<0.000000e+00> : vector<32x64xf32>
    %5 = tpu.matmul %4, %3, %cst {dimension_numbers = #tpu.dot_dimension_numbers<[1], [0], [0], [1], [0, 0, 1, 1], [], []>} : vector<32x32xf32>, vector<32x64xf32>, vector<32x64xf32> -> vector<32x64xf32>
    %c0_7 = arith.constant 0 : index
    %c0_8 = arith.constant 0 : index
    %6 = vector.load %arg4[%c0_7, %c0_8] : memref<32x1xf32, #tpu.memory_space<vmem>>, vector<32x1xf32>
    %7 = vector.broadcast %6 : vector<32x1xf32> to vector<32x64xf32>
    %8 = arith.addf %5, %7 : vector<32x64xf32>
    %cst_9 = arith.constant 0.000000e+00 : f32
    %9 = vector.broadcast %cst_9 : f32 to vector<32x64xf32>
    %10 = arith.maximumf %8, %9 : vector<32x64xf32>
    %c0_10 = arith.constant 0 : index
    %c0_11 = arith.constant 0 : index
    %11 = vector.load %arg5[%c0_10, %c0_11] : memref<32x32xf32, #tpu.memory_space<vmem>>, vector<32x32xf32>
    %cst_12 = arith.constant dense<0.000000e+00> : vector<32x64xf32>
    %12 = tpu.matmul %11, %10, %cst_12 {dimension_numbers = #tpu.dot_dimension_numbers<[1], [0], [0], [1], [0, 0, 1, 1], [], []>} : vector<32x32xf32>, vector<32x64xf32>, vector<32x64xf32> -> vector<32x64xf32>
    %c0_13 = arith.constant 0 : index
    %c0_14 = arith.constant 0 : index
    %13 = vector.load %arg6[%c0_13, %c0_14] : memref<32x1xf32, #tpu.memory_space<vmem>>, vector<32x1xf32>
    %14 = vector.broadcast %13 : vector<32x1xf32> to vector<32x64xf32>
    %15 = arith.addf %12, %14 : vector<32x64xf32>
    %16 = arith.addf %1, %15 : vector<32x64xf32>
    %cst_15 = arith.constant 0.000000e+00 : f32
    %17 = vector.broadcast %cst_15 : f32 to vector<32x64xf32>
    %18 = arith.maximumf %16, %17 : vector<32x64xf32>
    %c0_16 = arith.constant 0 : index
    %c0_17 = arith.constant 0 : index
    %c0_18 = arith.constant 0 : index
    %19 = vector.load %arg7[%c0_16, %c0_17, %c0_18] : memref<1x32x64xf32, #tpu.memory_space<vmem>>, vector<1x32x64xf32>
    %20 = vector.shape_cast %19 : vector<1x32x64xf32> to vector<32x64xf32>
    %21 = vector.shape_cast %18 : vector<32x64xf32> to vector<1x32x64xf32>
    tpu.vector_store %arg7[%c0_16, %c0_17, %c0_18], %21 {strides = array<i32>} : memref<1x32x64xf32, #tpu.memory_space<vmem>>, vector<1x32x64xf32>,
    return
  }
  func.func @transform_0(%arg0: i32, %arg1: i32) -> (i32, i32, i32) {
    %c0_i32 = arith.constant 0 : i32
    %c0_i32_0 = arith.constant 0 : i32
    return %arg0, %c0_i32, %arg1 : i32, i32, i32
  }
  func.func @transform_1(%arg0: i32, %arg1: i32) -> (i32, i32) {
    %c0_i32 = arith.constant 0 : i32
    %c0_i32_0 = arith.constant 0 : i32
    %c0_i32_1 = arith.constant 0 : i32
    return %c0_i32, %c0_i32_0 : i32, i32
  }
  func.func @transform_2(%arg0: i32, %arg1: i32) -> (i32, i32) {
    %c0_i32 = arith.constant 0 : i32
    %c0_i32_0 = arith.constant 0 : i32
    %c0_i32_1 = arith.constant 0 : i32
    return %c0_i32, %c0_i32_0 : i32, i32
  }
  func.func @transform_3(%arg0: i32, %arg1: i32) -> (i32, i32) {
    %c0_i32 = arith.constant 0 : i32
    %c0_i32_0 = arith.constant 0 : i32
    %c0_i32_1 = arith.constant 0 : i32
    return %c0_i32, %c0_i32_0 : i32, i32
  }
  func.func @transform_4(%arg0: i32, %arg1: i32) -> (i32, i32) {
    %c0_i32 = arith.constant 0 : i32
    %c0_i32_0 = arith.constant 0 : i32
    %c0_i32_1 = arith.constant 0 : i32
    return %c0_i32, %c0_i32_0 : i32, i32
  }
  func.func @transform_5(%arg0: i32, %arg1: i32) -> (i32, i32, i32) {
    %c0_i32 = arith.constant 0 : i32
    %c0_i32_0 = arith.constant 0 : i32
    return %arg0, %c0_i32, %arg1 : i32, i32, i32
  }
}

module attributes {stable_mosaic.version = 11 : i64} {
  func.func @kernel(%arg0: i32, %arg1: i32, %arg2: memref<1x32x64xf32, #tpu.memory_space<vmem>>, %arg3: memref<32x32xf32, #tpu.memory_space<vmem>>, %arg4: memref<32x1xf32, #tpu.memory_space<vmem>>, %arg5: memref<32x32xf32, #tpu.memory_space<vmem>>, %arg6: memref<32x1xf32, #tpu.memory_space<vmem>>, %arg7: memref<1x32x64xf32, #tpu.memory_space<vmem>>) attributes {dimension_semantics = [#tpu.dimension_semantics<parallel>, #tpu.dimension_semantics<parallel>], iteration_bounds = array<i64: 2, 1>, scalar_prefetch = 0 : i64, scratch_operands = 0 : i64, tpu.core_type = #tpu.core_type<tc>, window_params = [{transform_indices = @transform_0, window_bounds = array<i64: 1, 32, 64>}, {pipeline_mode = #tpu.pipeline_mode<synchronous>, transform_indices = @transform_1, window_bounds = array<i64: 32, 32>}, {pipeline_mode = #tpu.pipeline_mode<synchronous>, transform_indices = @transform_2, window_bounds = array<i64: 32, 1>}, {pipeline_mode = #tpu.pipeline_mode<synchronous>, transform_indices = @transform_3, window_bounds = array<i64: 32, 32>}, {pipeline_mode = #tpu.pipeline_mode<synchronous>, transform_indices = @transform_4, window_bounds = array<i64: 32, 1>}, {transform_indices = @transform_5, window_bounds = array<i64: 1, 32, 64>}]} {
    %c0 = arith.constant 0 : index
    %c0_0 = arith.constant 0 : index
    %c0_1 = arith.constant 0 : index
    %0 = vector.load %arg2[%c0, %c0_0, %c0_1] : memref<1x32x64xf32, #tpu.memory_space<vmem>>, vector<1x32x64xf32>
    %1 = vector.shape_cast %0 : vector<1x32x64xf32> to vector<32x64xf32>
    %c0_2 = arith.constant 0 : index
    %c0_3 = arith.constant 0 : index
    %c0_4 = arith.constant 0 : index
    %2 = vector.load %arg2[%c0_2, %c0_3, %c0_4] : memref<1x32x64xf32, #tpu.memory_space<vmem>>, vector<1x32x64xf32>
    %3 = vector.shape_cast %2 : vector<1x32x64xf32> to vector<32x64xf32>
    %c0_5 = arith.constant 0 : index
    %c0_6 = arith.constant 0 : index
    %4 = vector.load %arg3[%c0_5, %c0_6] : memref<32x32xf32, #tpu.memory_space<vmem>>, vector<32x32xf32>
    %cst = arith.constant dense<0.000000e+00> : vector<32x64xf32>
    %5 = tpu.matmul %4, %3, %cst {dimension_numbers = #tpu.dot_dimension_numbers<[1], [0], [0], [1], [0, 0, 1, 1], [], []>} : vector<32x32xf32>, vector<32x64xf32>, vector<32x64xf32> -> vector<32x64xf32>
    %c0_7 = arith.constant 0 : index
    %c0_8 = arith.constant 0 : index
    %6 = vector.load %arg4[%c0_7, %c0_8] : memref<32x1xf32, #tpu.memory_space<vmem>>, vector<32x1xf32>
    %7 = vector.broadcast %6 : vector<32x1xf32> to vector<32x64xf32>
    %8 = arith.addf %5, %7 : vector<32x64xf32>
    %cst_9 = arith.constant 0.000000e+00 : f32
    %9 = vector.broadcast %cst_9 : f32 to vector<32x64xf32>
    %10 = arith.maximumf %8, %9 : vector<32x64xf32>
    %c0_10 = arith.constant 0 : index
    %c0_11 = arith.constant 0 : index
    %11 = vector.load %arg5[%c0_10, %c0_11] : memref<32x32xf32, #tpu.memory_space<vmem>>, vector<32x32xf32>
    %cst_12 = arith.constant dense<0.000000e+00> : vector<32x64xf32>
    %12 = tpu.matmul %11, %10, %cst_12 {dimension_numbers = #tpu.dot_dimension_numbers<[1], [0], [0], [1], [0, 0, 1, 1], [], []>} : vector<32x32xf32>, vector<32x64xf32>, vector<32x64xf32> -> vector<32x64xf32>
    %c0_13 = arith.constant 0 : index
    %c0_14 = arith.constant 0 : index
    %13 = vector.load %arg6[%c0_13, %c0_14] : memref<32x1xf32, #tpu.memory_space<vmem>>, vector<32x1xf32>
    %14 = vector.broadcast %13 : vector<32x1xf32> to vector<32x64xf32>
    %15 = arith.addf %12, %14 : vector<32x64xf32>
    %16 = arith.addf %1, %15 : vector<32x64xf32>
    %cst_15 = arith.constant 0.000000e+00 : f32
    %17 = vector.broadcast %cst_15 : f32 to vector<32x64xf32>
    %18 = arith.maximumf %16, %17 : vector<32x64xf32>
    %c0_16 = arith.constant 0 : index
    %c0_17 = arith.constant 0 : index
    %c0_18 = arith.constant 0 : index
    %19 = vector.load %arg7[%c0_16, %c0_17, %c0_18] : memref<1x32x64xf32, #tpu.memory_space<vmem>>, vector<1x32x64xf32>
    %20 = vector.shape_cast %19 : vector<1x32x64xf32> to vector<32x64xf32>
    %21 = vector.shape_cast %18 : vector<32x64xf32> to vector<1x32x64xf32>
    tpu.vector_store %arg7[%c0_16, %c0_17, %c0_18], %21 {strides = array<i32>} : memref<1x32x64xf32, #tpu.memory_space<vmem>>, vector<1x32x64xf32>,
    return
  }
  func.func @transform_0(%arg0: i32, %arg1: i32) -> (i32, i32, i32) {
    %c0_i32 = arith.constant 0 : i32
    %c0_i32_0 = arith.constant 0 : i32
    return %arg0, %c0_i32, %arg1 : i32, i32, i32
  }
  func.func @transform_1(%arg0: i32, %arg1: i32) -> (i32, i32) {
    %c0_i32 = arith.constant 0 : i32
    %c0_i32_0 = arith.constant 0 : i32
    %c0_i32_1 = arith.constant 0 : i32
    return %c0_i32, %c0_i32_0 : i32, i32
  }
  func.func @transform_2(%arg0: i32, %arg1: i32) -> (i32, i32) {
    %c0_i32 = arith.constant 0 : i32
    %c0_i32_0 = arith.constant 0 : i32
    %c0_i32_1 = arith.constant 0 : i32
    return %c0_i32, %c0_i32_0 : i32, i32
  }
  func.func @transform_3(%arg0: i32, %arg1: i32) -> (i32, i32) {
    %c0_i32 = arith.constant 0 : i32
    %c0_i32_0 = arith.constant 0 : i32
    %c0_i32_1 = arith.constant 0 : i32
    return %c0_i32, %c0_i32_0 : i32, i32
  }
  func.func @transform_4(%arg0: i32, %arg1: i32) -> (i32, i32) {
    %c0_i32 = arith.constant 0 : i32
    %c0_i32_0 = arith.constant 0 : i32
    %c0_i32_1 = arith.constant 0 : i32
    return %c0_i32, %c0_i32_0 : i32, i32
  }
  func.func @transform_5(%arg0: i32, %arg1: i32) -> (i32, i32, i32) {
    %c0_i32 = arith.constant 0 : i32
    %c0_i32_0 = arith.constant 0 : i32
    return %arg0, %c0_i32, %arg1 : i32, i32, i32
  }
}

</mosaic_0001>

<llo_original>
// kernel: tpu_custom_call.1
$region0: #{tpu_custom_call.1}
  #allocation0 [shape = 'u32[]', space=smem, size = 0x4, offset = 0x4, fixed_abs, tag = 'smem constant byte address 0x4 - core index']
  #allocation1 [shape = 'u32[144,128]{1,0:T(1,128)}', space=vmem, size = 0x12000, scoped, tag = 'internal scratch']
  %s0 = inlined_call_operand.vmem [shape: f32[2,32,64], index: 0, kind: input, shape index: {}]
  %s1 = inlined_call_operand.hbm [shape: f32[32,32], index: 1, kind: input, shape index: {}]
  %s2 = inlined_call_operand.vmem [shape: f32[32,1], index: 2, kind: input, shape index: {}]
  %s3 = inlined_call_operand.hbm [shape: f32[32,32], index: 3, kind: input, shape index: {}]
  %s4 = inlined_call_operand.vmem [shape: f32[32,1], index: 4, kind: input, shape index: {}]
  %s5 = inlined_call_operand.hbm [shape: f32[2,32,64], index: 5, kind: output, shape index: {}]
  %s6 = sld [smem:[#allocation0]]
  $region61: #{tpu_custom_call.1} parent=0
    _
  %s8 = ssub.s32 1, %s6
  %s9 = scalar_select 0, %s8, %s6
  $region1: #{tpu_custom_call.1} parent=0
    #allocation2 [shape = 'u8[16384]{0}', space=vmem, size = 0x4000, scoped, tag = 'input window, operand 1, single buffered']
    #allocation3 [shape = 's32[2]{0}', space=sflag, size = 0x8, scoped, tag = 'scoped memory for tpu_custom_call.1']
    #allocation4 [shape = 's32[2]{0}', space=sflag, size = 0x8, scoped, tag = 'scoped memory for tpu_custom_call.1']
    #allocation5 [shape = 'u8[16384]{0}', space=vmem, size = 0x4000, scoped, tag = 'input window, operand 3, single buffered']
    #allocation6 [shape = 's32[1]{0}', space=sflag, size = 0x4, scoped, tag = 'scoped memory for tpu_custom_call.1']
    #allocation7 [shape = 'u8[32768]{0}', space=vmem, size = 0x8000, scoped, tag = 'output window, operand 0']
    %10 = vsyncpa [#allocation3], 0
    %11 = vsyncpa [#allocation6], 0
    %12 = vsyncpa [#allocation4], 0
    %s13 = scalar_lea.sflag [#allocation4], 1
    %14 = vsyncpa %s13, 0
    loop: start=0, step=1, limit=4
    $region2: #{tpu_custom_call.1} parent=1 // loop_pre_header
      _
    $region3: #{tpu_custom_call.1} parent=1 // loop_header
      %s16 = sphi 0, %s20
      %p17 = scmp.ge.s32.totalorder %s16, 4
      %s23 = sphi 0, %s35
      %s24 = sphi 0, %s31
      %s25 = sphi 0, %s23
      %s26 = sphi 0, %s24
      %s27 = sphi 0, %s25
      %s28 = sphi 0, %s26
      %s40 = sphi 0, %s42
      %s43 = sphi 0, %s40
      %s44 = sphi 0, %s43
      %s60 = sphi 0, %s44
      %s64 = sphi 0, %s64
      %s66 = sphi 0, %s64
      %s67 = sphi 0, %s66
      %s81 = sphi 0, %s67
      %s85 = sphi 0, %s85
      %s87 = sphi 0, %s85
      %s88 = sphi 0, %s87
      %s102 = sphi 0, %s88
      %s106 = sphi 0, %s106
      %s108 = sphi 0, %s106
      %s109 = sphi 0, %s108
      %s123 = sphi 0, %s109
      %s127 = sphi 0, %s127
      %s129 = sphi 0, %s127
      %s130 = sphi 0, %s129
      %s144 = sphi 0, %s130
      %s152 = sphi 0, %s154
      %s155 = sphi 0, %s152
      %s156 = sphi 0, %s155
      %s172 = sphi 0, %s156
    $region4: #{tpu_custom_call.1} parent=1 // loop_header_branch
      %19 = sbr.rel (%p17) target = $region8
    $region5: #{tpu_custom_call.1} parent=1 // loop_body
      %s21 = ssub.s32 %s16, 1
      %s22 = ssub.s32 %s16, 2
      %s29 = sadd.s32 1, %s24
      %p30 = scmp.ge.s32.totalorder %s29, 1
      %s31 = scalar_select %p30, 0, %s29
      %s32 = sadd.s32 1, %s23
      %s33 = scalar_select %p30, %s32, %s23
      %p34 = scmp.ge.s32.totalorder %s33, 2
      %s35 = scalar_select %p34, 0, %s33
      %s36 = ssub.s32 %s23, %s35
      %s37 = ssub.s32 %s24, %s31
      %s38 = sor.u32 %s36, %s37
      %p39 = scmp.eq.s32.totalorder %s38, 0
      %s41 = sadd.s32 %s40, 1
      %s42 = scalar_select %p39, %s40, %s41
      %p45 = pneg %p39
      %p46 = scmp.eq.s32.totalorder %s16, 1
      %p47 = por %p45, %p46
      %p48 = scmp.ne.s32.totalorder %s40, %s43
      %p49 = scmp.eq.s32.totalorder %s16, 0
      %p50 = por %p48, %p49
      %p51 = scmp.ne.s32.totalorder %s40, %s43
      %p52 = scmp.eq.s32.totalorder %s21, 1
      %p53 = por %p51, %p52
      %p54 = scmp.ne.s32.totalorder %s43, %s44
      %p55 = scmp.eq.s32.totalorder %s21, 0
      %p56 = por %p54, %p55
      %p57 = scmp.ne.s32.totalorder %s43, %s44
      %p58 = scmp.eq.s32.totalorder %s22, 1
      %p59 = por %p57, %p58
      %p61 = scmp.ne.s32.totalorder %s44, %s60
      %p62 = scmp.eq.s32.totalorder %s22, 0
      %p63 = por %p61, %p62
      %s65 = sadd.s32 %s64, 1
      %p68 = scmp.eq.s32.totalorder %s16, 1
      %p69 = scmp.ne.s32.totalorder %s64, %s66
      %p70 = scmp.eq.s32.totalorder %s16, 0
      %p71 = por %p69, %p70
      %p72 = scmp.ne.s32.totalorder %s64, %s66
      %p73 = scmp.eq.s32.totalorder %s21, 1
      %p74 = por %p72, %p73
      %p75 = scmp.ne.s32.totalorder %s66, %s67
      %p76 = scmp.eq.s32.totalorder %s21, 0
      %p77 = por %p75, %p76
      %p78 = scmp.ne.s32.totalorder %s66, %s67
      %p79 = scmp.eq.s32.totalorder %s22, 1
      %p80 = por %p78, %p79
      %p82 = scmp.ne.s32.totalorder %s67, %s81
      %p83 = scmp.eq.s32.totalorder %s22, 0
      %p84 = por %p82, %p83
      %s86 = sadd.s32 %s85, 1
      %p89 = scmp.eq.s32.totalorder %s16, 1
      %p90 = scmp.ne.s32.totalorder %s85, %s87
      %p91 = scmp.eq.s32.totalorder %s16, 0
      %p92 = por %p90, %p91
      %p93 = scmp.ne.s32.totalorder %s85, %s87
      %p94 = scmp.eq.s32.totalorder %s21, 1
      %p95 = por %p93, %p94
      %p96 = scmp.ne.s32.totalorder %s87, %s88
      %p97 = scmp.eq.s32.totalorder %s21, 0
      %p98 = por %p96, %p97
      %p99 = scmp.ne.s32.totalorder %s87, %s88
      %p100 = scmp.eq.s32.totalorder %s22, 1
      %p101 = por %p99, %p100
      %p103 = scmp.ne.s32.totalorder %s88, %s102
      %p104 = scmp.eq.s32.totalorder %s22, 0
      %p105 = por %p103, %p104
      %s107 = sadd.s32 %s106, 1
      %p110 = scmp.eq.s32.totalorder %s16, 1
      %p111 = scmp.ne.s32.totalorder %s106, %s108
      %p112 = scmp.eq.s32.totalorder %s16, 0
      %p113 = por %p111, %p112
      %p114 = scmp.ne.s32.totalorder %s106, %s108
      %p115 = scmp.eq.s32.totalorder %s21, 1
      %p116 = por %p114, %p115
      %p117 = scmp.ne.s32.totalorder %s108, %s109
      %p118 = scmp.eq.s32.totalorder %s21, 0
      %p119 = por %p117, %p118
      %p120 = scmp.ne.s32.totalorder %s108, %s109
      %p121 = scmp.eq.s32.totalorder %s22, 1
      %p122 = por %p120, %p121
      %p124 = scmp.ne.s32.totalorder %s109, %s123
      %p125 = scmp.eq.s32.totalorder %s22, 0
      %p126 = por %p124, %p125
      %s128 = sadd.s32 %s127, 1
      %p131 = scmp.eq.s32.totalorder %s16, 1
      %p132 = scmp.ne.s32.totalorder %s127, %s129
      %p133 = scmp.eq.s32.totalorder %s16, 0
      %p134 = por %p132, %p133
      %p135 = scmp.ne.s32.totalorder %s127, %s129
      %p136 = scmp.eq.s32.totalorder %s21, 1
      %p137 = por %p135, %p136
      %p138 = scmp.ne.s32.totalorder %s129, %s130
      %p139 = scmp.eq.s32.totalorder %s21, 0
      %p140 = por %p138, %p139
      %p141 = scmp.ne.s32.totalorder %s129, %s130
      %p142 = scmp.eq.s32.totalorder %s22, 1
      %p143 = por %p141, %p142
      %p145 = scmp.ne.s32.totalorder %s130, %s144
      %p146 = scmp.eq.s32.totalorder %s22, 0
      %p147 = por %p145, %p146
      %s148 = ssub.s32 %s23, %s35
      %s149 = ssub.s32 %s24, %s31
      %s150 = sor.u32 %s148, %s149
      %p151 = scmp.eq.s32.totalorder %s150, 0
      %s153 = sadd.s32 %s152, 1
      %s154 = scalar_select %p151, %s152, %s153
      %p157 = pneg %p151
      %p158 = scmp.eq.s32.totalorder %s16, 1
      %p159 = por %p157, %p158
      %p160 = scmp.ne.s32.totalorder %s152, %s155
      %p161 = scmp.eq.s32.totalorder %s16, 0
      %p162 = por %p160, %p161
      %p163 = scmp.ne.s32.totalorder %s152, %s155
      %p164 = scmp.eq.s32.totalorder %s21, 1
      %p165 = por %p163, %p164
      %p166 = scmp.ne.s32.totalorder %s155, %s156
      %p167 = scmp.eq.s32.totalorder %s21, 0
      %p168 = por %p166, %p167
      %p169 = scmp.ne.s32.totalorder %s155, %s156
      %p170 = scmp.eq.s32.totalorder %s22, 1
      %p171 = por %p169, %p170
      %p173 = scmp.ne.s32.totalorder %s156, %s172
      %p174 = scmp.eq.s32.totalorder %s22, 0
      %p175 = por %p173, %p174
      %p176 = scmp.le.s32.totalorder 1, %s16
      %p177 = scmp.lt.s32.totalorder %s16, 3
      %p178 = pnand %p176, %p177
      %p179 = pneg %p178
      // Predicated region
      $region9: #{tpu_custom_call.1} parent=5 // pred_check
        _
      $region10: #{tpu_custom_call.1} parent=5 // pred_check_branch
        %181 = sbr.rel (%p178) target = $region12
      $region11: #{tpu_custom_call.1} parent=5 // pred_region
        %s182 = ssub.s32 %s16, 1
        // Predicated region
        $region13: #{tpu_custom_call.1} parent=11 // pred_check
          %p183 = pneg %p77
        $region14: #{tpu_custom_call.1} parent=11 // pred_check_branch
          %185 = sbr.rel (%p183) target = $region16
        $region15: #{tpu_custom_call.1} parent=11 // pred_region
          %s187 = ssub.s32 512, 512
          %188 = vsyncadd [#allocation3], %s187
          %s189 = sshll.u32 [#allocation2], 4
          %s190 = int_to_ptr.vmem [resolvable:$true] %s189
          %195 = dma.hbm_to_vmem [thread:$0]  %s1, 512, %s190, [#allocation3], 128, 128, 8
        $region16: #{tpu_custom_call.1} parent=11 // pred_fallthru
          _
        // Predicated region
        $region17: #{tpu_custom_call.1} parent=11 // pred_check
          %p196 = pneg %p98
        $region18: #{tpu_custom_call.1} parent=11 // pred_check_branch
          %198 = sbr.rel (%p196) target = $region20
        $region19: #{tpu_custom_call.1} parent=11 // pred_region
          _
        $region20: #{tpu_custom_call.1} parent=11 // pred_fallthru
          _
        // Predicated region
        $region21: #{tpu_custom_call.1} parent=11 // pred_check
          %p199 = pneg %p119
        $region22: #{tpu_custom_call.1} parent=11 // pred_check_branch
          %201 = sbr.rel (%p199) target = $region24
        $region23: #{tpu_custom_call.1} parent=11 // pred_region
          %s203 = ssub.s32 512, 512
          %204 = vsyncadd [#allocation6], %s203
          %s205 = sshll.u32 [#allocation5], 4
          %s206 = int_to_ptr.vmem [resolvable:$true] %s205
          %211 = dma.hbm_to_vmem [thread:$0]  %s3, 512, %s206, [#allocation6], 128, 128, 8
        $region24: #{tpu_custom_call.1} parent=11 // pred_fallthru
          _
        // Predicated region
        $region25: #{tpu_custom_call.1} parent=11 // pred_check
          %p212 = pneg %p140
        $region26: #{tpu_custom_call.1} parent=11 // pred_check_branch
          %214 = sbr.rel (%p212) target = $region28
        $region27: #{tpu_custom_call.1} parent=11 // pred_region
          _
        $region28: #{tpu_custom_call.1} parent=11 // pred_fallthru
          _
      $region12: #{tpu_custom_call.1} parent=5 // pred_fallthru
        _
      %p215 = scmp.lt.s32.totalorder %s16, 2
      // Predicated region
      $region29: #{tpu_custom_call.1} parent=5 // pred_check
        %p216 = pneg %p215
      $region30: #{tpu_custom_call.1} parent=5 // pred_check_branch
        %218 = sbr.rel (%p216) target = $region32
      $region31: #{tpu_custom_call.1} parent=5 // pred_region
        // Predicated region
        $region33: #{tpu_custom_call.1} parent=31 // pred_check
          %p219 = pneg %p50
        $region34: #{tpu_custom_call.1} parent=31 // pred_check_branch
          %221 = sbr.rel (%p219) target = $region36
        $region35: #{tpu_custom_call.1} parent=31 // pred_region
          %p222 = scmp.lt.s32.totalorder %s23, 1
          %s223 = scalar_select %p222, %s23, 1
          %p224 = scmp.lt.s32.totalorder %s24, 0
          %s225 = scalar_select %p224, %s24, 0
          %s226 = smul.addr %s223, 4
          %s227 = sadd.s32 %s225, %s226
          %s228 = smul.addr %s227, 8
          %s229 = scalar_lea.vmem %s0, %s228
        $region36: #{tpu_custom_call.1} parent=31 // pred_fallthru
          _
      $region32: #{tpu_custom_call.1} parent=5 // pred_fallthru
        _
      %p230 = scmp.le.s32.totalorder 1, %s16
      %p231 = scmp.lt.s32.totalorder %s16, 3
      %p232 = pnand %p230, %p231
      %p233 = pneg %p232
      // Predicated region
      $region37: #{tpu_custom_call.1} parent=5 // pred_check
        _
      $region38: #{tpu_custom_call.1} parent=5 // pred_check_branch
        %235 = sbr.rel (%p232) target = $region40
      $region39: #{tpu_custom_call.1} parent=5 // pred_region
        %s236 = ssub.s32 %s16, 1
        // Predicated region
        $region41: #{tpu_custom_call.1} parent=39 // pred_check
          %p237 = pneg %p77
        $region42: #{tpu_custom_call.1} parent=39 // pred_check_branch
          %239 = sbr.rel (%p237) target = $region44
        $region43: #{tpu_custom_call.1} parent=39 // pred_region
          %240 = dma.done [#allocation3], 512
        $region44: #{tpu_custom_call.1} parent=39 // pred_fallthru
          _
        // Predicated region
        $region45: #{tpu_custom_call.1} parent=39 // pred_check
          %p241 = pneg %p119
        $region46: #{tpu_custom_call.1} parent=39 // pred_check_branch
          %243 = sbr.rel (%p241) target = $region48
        $region47: #{tpu_custom_call.1} parent=39 // pred_region
          %244 = dma.done [#allocation6], 512
        $region48: #{tpu_custom_call.1} parent=39 // pred_fallthru
          _
        %p245 = scmp.lt.s32.totalorder %s25, 1
        %s246 = scalar_select %p245, %s25, 1
        %p247 = scmp.lt.s32.totalorder %s26, 0
        %s248 = scalar_select %p247, %s26, 0
        %s249 = smul.addr %s246, 4
        %s250 = sadd.s32 %s248, %s249
        %s251 = smul.addr %s250, 8
        %s252 = scalar_lea.vmem %s0, %s251
        %p253 = pneg %p56
        %p254 = pneg %p53
        %p255 = pneg %p77
        %p256 = pneg %p74
        %p257 = pneg %p98
        %p258 = pneg %p95
        %p259 = pneg %p119
        %p260 = pneg %p116
        %p261 = pneg %p140
        %p262 = pneg %p137
        %p263 = pneg %p168
        %p264 = pneg %p165
        %s265 = sand.u32 %s155, 1
        %s266 = scalar_lea.sflag [#allocation4], %s265
        %s267 = sand.u32 %s155, 1
        %s268 = smul.addr %s267, 32
        %s269 = scalar_lea.vmem [#allocation7], %s268
        %p270 = scmp.lt.s32.totalorder %s25, 1
        %s271 = scalar_select %p270, %s25, 1
        %p272 = scmp.lt.s32.totalorder %s26, 0
        %s273 = scalar_select %p272, %s26, 0
        %s274 = smul.addr %s271, 4
        %s275 = sadd.s32 %s273, %s274
        %s276 = smul.addr %s275, 8
        %s277 = scalar_lea.vmem %s0, %s276
        %v278 = vld [vmem:[%s277] sm:$0xff]
        %v279 = vld [vmem:[%s277 + $0x8] sm:$0xff]
        %v280 = vld [vmem:[%s277 + $0x10] sm:$0xff]
        %v281 = vld [vmem:[%s277 + $0x18] sm:$0xff]
        %v282 = vld [vmem:[#allocation2] sm:$0xff]
        %v283 = vld [vmem:[#allocation2 + $0x8] sm:$0xff]
        %v284 = vld [vmem:[#allocation2 + $0x10] sm:$0xff]
        %v285 = vld [vmem:[#allocation2 + $0x18] sm:$0xff]
        %v286 = vld [vmem:[%s2] sm:$0xff]
        %v287 = vld [vmem:[%s2 + $0x8] sm:$0xff]
        %v288 = vld [vmem:[%s2 + $0x10] sm:$0xff]
        %v289 = vld [vmem:[%s2 + $0x18] sm:$0xff]
        %291 = vset.pattern.permute.xlu0 0
        %292 = vperm.xlu0 %291, %v286
        %v293 = vpop.permute.xlu0 %292
        %296 = vset.pattern.permute.xlu0 0
        %297 = vperm.xlu0 %296, %v287
        %v298 = vpop.permute.xlu0 %297
        %301 = vset.pattern.permute.xlu0 0
        %302 = vperm.xlu0 %301, %v288
        %v303 = vpop.permute.xlu0 %302
        %306 = vset.pattern.permute.xlu0 0
        %307 = vperm.xlu0 %306, %v289
        %v308 = vpop.permute.xlu0 %307
        %vm310 = vcmask 261120
        %v312 = vsel %vm310, %v282, 0
        %v315 = vsel %vm310, %v283, 0
        %v318 = vsel %vm310, %v284, 0
        %v321 = vsel %vm310, %v285, 0
        %323 = vmatprep.subr.mxu0 0.0
        %324 = vmatpush1.msra.mxu0 0.0
        %325 = vmatprep.subr.mxu0 0.0
        %326 = vmatpush1.msra.mxu0 0.0
        %327 = vmatprep.subr.mxu0 0.0
        %328 = vmatpush1.msra.mxu0 0.0
        %329 = vmatprep.subr.mxu0 0.0
        %330 = vmatpush1.msra.mxu0 0.0
        %331 = vmatprep.subr.mxu0 0.0
        %332 = vmatpush1.msra.mxu0 0.0
        %333 = vmatprep.subr.mxu0 0.0
        %334 = vmatpush1.msra.mxu0 0.0
        %335 = vmatprep.subr.mxu0 0.0
        %336 = vmatpush1.msra.mxu0 0.0
        %337 = vmatprep.subr.mxu0 0.0
        %338 = vmatpush1.msra.mxu0 0.0
        %339 = vmatprep.subr.mxu0 0.0
        %340 = vmatpush1.msra.mxu0 0.0
        %341 = vmatprep.subr.mxu0 0.0
        %342 = vmatpush1.msra.mxu0 0.0
        %343 = vmatprep.subr.mxu0 0.0
        %344 = vmatpush1.msra.mxu0 0.0
        %345 = vmatprep.subr.mxu0 0.0
        %346 = vmatpush1.msra.mxu0 0.0
        %347 = vmatprep.subr.mxu0 0.0
        %348 = vmatpush1.msra.mxu0 %v281
        %349 = vmatprep.subr.mxu0 0.0
        %350 = vmatpush1.msra.mxu0 %v280
        %351 = vmatprep.subr.mxu0 0.0
        %352 = vmatpush1.msra.mxu0 %v279
        %353 = vmatprep.subr.mxu0 0.0
        %354 = vmatpush1.msra.mxu0 %v278
        %355 = vmatprep.subr.mxu0 0.0
        %356 = vmatpush2.msra.mxu0 0.0
        %357 = vmatprep.subr.mxu0 0.0
        %358 = vmatpush2.msra.mxu0 0.0
        %359 = vmatprep.subr.mxu0 0.0
        %360 = vmatpush2.msra.mxu0 0.0
        %361 = vmatprep.subr.mxu0 0.0
        %362 = vmatpush2.msra.mxu0 0.0
        %363 = vmatprep.subr.mxu0 0.0
        %364 = vmatpush2.msra.mxu0 0.0
        %365 = vmatprep.subr.mxu0 0.0
        %366 = vmatpush2.msra.mxu0 0.0
        %367 = vmatprep.subr.mxu0 0.0
        %368 = vmatpush2.msra.mxu0 0.0
        %369 = vmatprep.subr.mxu0 0.0
        %370 = vmatpush2.msra.mxu0 0.0
        %371 = vmatprep.subr.mxu0 0.0
        %372 = vmatpush2.msra.mxu0 0.0
        %373 = vmatprep.subr.mxu0 0.0
        %374 = vmatpush2.msra.mxu0 0.0
        %375 = vmatprep.subr.mxu0 0.0
        %376 = vmatpush2.msra.mxu0 0.0
        %377 = vmatprep.subr.mxu0 0.0
        %378 = vmatpush2.msra.mxu0 0.0
        %379 = vmatprep.subr.mxu0 0.0
        %380 = vmatpush2.msra.mxu0 0.0
        %381 = vmatprep.subr.mxu0 0.0
        %382 = vmatpush2.msra.mxu0 0.0
        %383 = vmatprep.subr.mxu0 0.0
        %384 = vmatpush2.msra.mxu0 0.0
        %385 = vmatprep.subr.mxu0 0.0
        %386 = vmatpush2.msra.mxu0 0.0
        %387 = vmatprep.mubr.f32.mxu0 0.0
        %388 = vmatmul.mubr.f32.gmra.mxu0 %v312
        %v389 = vpop.f32.mrf.mxu0
        %v390 = vadd.f32 %v293, %v389
        %v391 = vpop.f32.mrf.mxu0
        %392 = vmatprep.mubr.f32.mxu0 0.0
        %393 = vmatmul.mubr.f32.gmra.mxu0 %v315
        %v394 = vpop.f32.mrf.mxu0
        %v395 = vadd.f32 %v298, %v394
        %v396 = vpop.f32.mrf.mxu0
        %397 = vmatprep.mubr.f32.mxu0 0.0
        %398 = vmatmul.mubr.f32.gmra.mxu0 %v318
        %v399 = vpop.f32.mrf.mxu0
        %v400 = vadd.f32 %v303, %v399
        %v401 = vpop.f32.mrf.mxu0
        %402 = vmatprep.mubr.f32.mxu0 0.0
        %403 = vmatmul.mubr.f32.gmra.mxu0 %v321
        %v404 = vpop.f32.mrf.mxu0
        %v405 = vadd.f32 %v308, %v404
        %v406 = vpop.f32.mrf.mxu0
        %407 = vdwg.mxu0
        %v408 = vmax.f32 %v390, 0.0
        %v409 = vmax.f32 %v395, 0.0
        %v410 = vmax.f32 %v400, 0.0
        %v411 = vmax.f32 %v405, 0.0
        %v412 = vld [vmem:[#allocation5] sm:$0xff]
        %v413 = vld [vmem:[#allocation5 + $0x8] sm:$0xff]
        %v414 = vld [vmem:[#allocation5 + $0x10] sm:$0xff]
        %v415 = vld [vmem:[#allocation5 + $0x18] sm:$0xff]
        %v416 = vld [vmem:[%s4] sm:$0xff]
        %v417 = vld [vmem:[%s4 + $0x8] sm:$0xff]
        %v418 = vld [vmem:[%s4 + $0x10] sm:$0xff]
        %v419 = vld [vmem:[%s4 + $0x18] sm:$0xff]
        %421 = vset.pattern.permute.xlu0 0
        %422 = vperm.xlu0 %421, %v416
        %v423 = vpop.permute.xlu0 %422
        %426 = vset.pattern.permute.xlu0 0
        %427 = vperm.xlu0 %426, %v417
        %v428 = vpop.permute.xlu0 %427
        %431 = vset.pattern.permute.xlu0 0
        %432 = vperm.xlu0 %431, %v418
        %v433 = vpop.permute.xlu0 %432
        %436 = vset.pattern.permute.xlu0 0
        %437 = vperm.xlu0 %436, %v419
        %v438 = vpop.permute.xlu0 %437
        %v441 = vsel %vm310, %v412, 0
        %v444 = vsel %vm310, %v413, 0
        %v447 = vsel %vm310, %v414, 0
        %v450 = vsel %vm310, %v415, 0
        %452 = vmatprep.subr.mxu0 0.0
        %453 = vmatpush1.msra.mxu0 0.0
        %454 = vmatprep.subr.mxu0 0.0
        %455 = vmatpush1.msra.mxu0 0.0
        %456 = vmatprep.subr.mxu0 0.0
        %457 = vmatpush1.msra.mxu0 0.0
        %458 = vmatprep.subr.mxu0 0.0
        %459 = vmatpush1.msra.mxu0 0.0
        %460 = vmatprep.subr.mxu0 0.0
        %461 = vmatpush1.msra.mxu0 0.0
        %462 = vmatprep.subr.mxu0 0.0
        %463 = vmatpush1.msra.mxu0 0.0
        %464 = vmatprep.subr.mxu0 0.0
        %465 = vmatpush1.msra.mxu0 0.0
        %466 = vmatprep.subr.mxu0 0.0
        %467 = vmatpush1.msra.mxu0 0.0
        %468 = vmatprep.subr.mxu0 0.0
        %469 = vmatpush1.msra.mxu0 0.0
        %470 = vmatprep.subr.mxu0 0.0
        %471 = vmatpush1.msra.mxu0 0.0
        %472 = vmatprep.subr.mxu0 0.0
        %473 = vmatpush1.msra.mxu0 0.0
        %474 = vmatprep.subr.mxu0 0.0
        %475 = vmatpush1.msra.mxu0 0.0
        %476 = vmatprep.subr.mxu0 0.0
        %477 = vmatpush1.msra.mxu0 %v411
        %478 = vmatprep.subr.mxu0 0.0
        %479 = vmatpush1.msra.mxu0 %v410
        %480 = vmatprep.subr.mxu0 0.0
        %481 = vmatpush1.msra.mxu0 %v409
        %482 = vmatprep.subr.mxu0 0.0
        %483 = vmatpush1.msra.mxu0 %v408
        %484 = vmatprep.subr.mxu0 0.0
        %485 = vmatpush2.msra.mxu0 0.0
        %486 = vmatprep.subr.mxu0 0.0
        %487 = vmatpush2.msra.mxu0 0.0
        %488 = vmatprep.subr.mxu0 0.0
        %489 = vmatpush2.msra.mxu0 0.0
        %490 = vmatprep.subr.mxu0 0.0
        %491 = vmatpush2.msra.mxu0 0.0
        %492 = vmatprep.subr.mxu0 0.0
        %493 = vmatpush2.msra.mxu0 0.0
        %494 = vmatprep.subr.mxu0 0.0
        %495 = vmatpush2.msra.mxu0 0.0
        %496 = vmatprep.subr.mxu0 0.0
        %497 = vmatpush2.msra.mxu0 0.0
        %498 = vmatprep.subr.mxu0 0.0
        %499 = vmatpush2.msra.mxu0 0.0
        %500 = vmatprep.subr.mxu0 0.0
        %501 = vmatpush2.msra.mxu0 0.0
        %502 = vmatprep.subr.mxu0 0.0
        %503 = vmatpush2.msra.mxu0 0.0
        %504 = vmatprep.subr.mxu0 0.0
        %505 = vmatpush2.msra.mxu0 0.0
        %506 = vmatprep.subr.mxu0 0.0
        %507 = vmatpush2.msra.mxu0 0.0
        %508 = vmatprep.subr.mxu0 0.0
        %509 = vmatpush2.msra.mxu0 0.0
        %510 = vmatprep.subr.mxu0 0.0
        %511 = vmatpush2.msra.mxu0 0.0
        %512 = vmatprep.subr.mxu0 0.0
        %513 = vmatpush2.msra.mxu0 0.0
        %514 = vmatprep.subr.mxu0 0.0
        %515 = vmatpush2.msra.mxu0 0.0
        %516 = vmatprep.mubr.f32.mxu0 0.0
        %517 = vmatmul.mubr.f32.gmra.mxu0 %v441
        %v518 = vpop.f32.mrf.mxu0
        %v519 = vadd.f32 %v423, %v518
        %v520 = vpop.f32.mrf.mxu0
        %521 = vmatprep.mubr.f32.mxu0 0.0
        %522 = vmatmul.mubr.f32.gmra.mxu0 %v444
        %v523 = vpop.f32.mrf.mxu0
        %v524 = vadd.f32 %v428, %v523
        %v525 = vpop.f32.mrf.mxu0
        %526 = vmatprep.mubr.f32.mxu0 0.0
        %527 = vmatmul.mubr.f32.gmra.mxu0 %v447
        %v528 = vpop.f32.mrf.mxu0
        %v529 = vadd.f32 %v433, %v528
        %v530 = vpop.f32.mrf.mxu0
        %531 = vmatprep.mubr.f32.mxu0 0.0
        %532 = vmatmul.mubr.f32.gmra.mxu0 %v450
        %v533 = vpop.f32.mrf.mxu0
        %v534 = vadd.f32 %v438, %v533
        %v535 = vpop.f32.mrf.mxu0
        %536 = vdwg.mxu0
        %v537 = vadd.f32 %v278, %v519
        %v538 = vadd.f32 %v279, %v524
        %v539 = vadd.f32 %v280, %v529
        %v540 = vadd.f32 %v281, %v534
        %v541 = vmax.f32 %v537, 0.0
        %v542 = vmax.f32 %v538, 0.0
        %v543 = vmax.f32 %v539, 0.0
        %v544 = vmax.f32 %v540, 0.0
        %vm545 = vcmask 523264
        %546 = vst.msk [vmem:[%s269] sm:$0xff] %vm545, %v541
        %547 = vst.msk [vmem:[%s269 + $0x8] sm:$0xff] %vm545, %v542
        %548 = vst.msk [vmem:[%s269 + $0x10] sm:$0xff] %vm545, %v543
        %549 = vst.msk [vmem:[%s269 + $0x18] sm:$0xff] %vm545, %v544
        %s550 = sand.u32 %s155, 1
        %s551 = scalar_lea.sflag [#allocation4], %s550
        %s552 = sand.u32 %s155, 1
        %s553 = smul.addr %s552, 32
        %s554 = scalar_lea.vmem [#allocation7], %s553
        // Predicated region
        $region49: #{tpu_custom_call.1} parent=39 // pred_check
          %p555 = pneg %p165
        $region50: #{tpu_custom_call.1} parent=39 // pred_check_branch
          %557 = sbr.rel (%p555) target = $region52
        $region51: #{tpu_custom_call.1} parent=39 // pred_region
          %s559 = ssub.s32 512, 512
          %560 = vsyncadd %s551, %s559
          %s561 = smul.addr %s25, 4
          %s562 = sadd.s32 %s26, %s561
          %s563 = smul.addr %s562, 128
          %s564 = scalar_lea.hbm %s5, %s563
          %s565 = sshll.u32 %s554, 4
          %s566 = int_to_ptr.vmem [resolvable:$true] %s565
          %571 = dma.vmem_to_hbm [thread:$0]  %s566, 512, %s564, %s551, 128, 128, 8
        $region52: #{tpu_custom_call.1} parent=39 // pred_fallthru
          _
      $region40: #{tpu_custom_call.1} parent=5 // pred_fallthru
        _
      %p572 = scmp.le.s32.totalorder 2, %s16
      // Predicated region
      $region53: #{tpu_custom_call.1} parent=5 // pred_check
        %p573 = pneg %p572
      $region54: #{tpu_custom_call.1} parent=5 // pred_check_branch
        %575 = sbr.rel (%p573) target = $region56
      $region55: #{tpu_custom_call.1} parent=5 // pred_region
        %s576 = ssub.s32 %s16, 2
        // Predicated region
        $region57: #{tpu_custom_call.1} parent=55 // pred_check
          %p577 = pneg %p171
        $region58: #{tpu_custom_call.1} parent=55 // pred_check_branch
          %579 = sbr.rel (%p577) target = $region60
        $region59: #{tpu_custom_call.1} parent=55 // pred_region
          %s580 = sand.u32 %s156, 1
          %s581 = scalar_lea.sflag [#allocation4], %s580
          %s582 = sand.u32 %s156, 1
          %s583 = smul.addr %s582, 32
          %s584 = scalar_lea.vmem [#allocation7], %s583
          %585 = dma.done %s581, 512
        $region60: #{tpu_custom_call.1} parent=55 // pred_fallthru
          _
      $region56: #{tpu_custom_call.1} parent=5 // pred_fallthru
        _
    $region6: #{tpu_custom_call.1} parent=1 // loop_footer
      %s20 = sadd.s32 1, %s16
    $region7: #{tpu_custom_call.1} parent=1 // loop_footer_branch
      %15 = sbr.rel target = $region3
    $region8: #{tpu_custom_call.1} parent=1 // loop_exit
      _
    %586 = vsyncpa [#allocation3], 1
    %s587 = scalar_lea.sflag [#allocation3], 1
    %588 = vsyncpa %s587, 1
    %589 = vsyncpa [#allocation6], 1
    %590 = vsyncpa [#allocation4], 1
    %s591 = scalar_lea.sflag [#allocation4], 1
    %592 = vsyncpa %s591, 1

// kernel: tpu_custom_call.1
$region0: #{tpu_custom_call.1}
  #allocation0 [shape = 'u32[]', space=smem, size = 0x4, offset = 0x4, fixed_abs, tag = 'smem constant byte address 0x4 - core index']
  #allocation1 [shape = 'u32[144,128]{1,0:T(1,128)}', space=vmem, size = 0x12000, scoped, tag = 'internal scratch']
  %s0 = inlined_call_operand.vmem [shape: f32[2,32,64], index: 0, kind: input, shape index: {}]
  %s1 = inlined_call_operand.hbm [shape: f32[32,32], index: 1, kind: input, shape index: {}]
  %s2 = inlined_call_operand.vmem [shape: f32[32,1], index: 2, kind: input, shape index: {}]
  %s3 = inlined_call_operand.hbm [shape: f32[32,32], index: 3, kind: input, shape index: {}]
  %s4 = inlined_call_operand.vmem [shape: f32[32,1], index: 4, kind: input, shape index: {}]
  %s5 = inlined_call_operand.hbm [shape: f32[2,32,64], index: 5, kind: output, shape index: {}]
  %s6 = sld [smem:[#allocation0]]
  $region61: #{tpu_custom_call.1} parent=0
    _
  %s8 = ssub.s32 1, %s6
  %s9 = scalar_select 0, %s8, %s6
  $region1: #{tpu_custom_call.1} parent=0
    #allocation2 [shape = 'u8[16384]{0}', space=vmem, size = 0x4000, scoped, tag = 'input window, operand 1, single buffered']
    #allocation3 [shape = 's32[2]{0}', space=sflag, size = 0x8, scoped, tag = 'scoped memory for tpu_custom_call.1']
    #allocation4 [shape = 's32[2]{0}', space=sflag, size = 0x8, scoped, tag = 'scoped memory for tpu_custom_call.1']
    #allocation5 [shape = 'u8[16384]{0}', space=vmem, size = 0x4000, scoped, tag = 'input window, operand 3, single buffered']
    #allocation6 [shape = 's32[1]{0}', space=sflag, size = 0x4, scoped, tag = 'scoped memory for tpu_custom_call.1']
    #allocation7 [shape = 'u8[32768]{0}', space=vmem, size = 0x8000, scoped, tag = 'output window, operand 0']
    %10 = vsyncpa [#allocation3], 0
    %11 = vsyncpa [#allocation6], 0
    %12 = vsyncpa [#allocation4], 0
    %s13 = scalar_lea.sflag [#allocation4], 1
    %14 = vsyncpa %s13, 0
    loop: start=0, step=1, limit=4
    $region2: #{tpu_custom_call.1} parent=1 // loop_pre_header
      _
    $region3: #{tpu_custom_call.1} parent=1 // loop_header
      %s16 = sphi 0, %s20
      %p17 = scmp.ge.s32.totalorder %s16, 4
      %s23 = sphi 0, %s35
      %s24 = sphi 0, %s31
      %s25 = sphi 0, %s23
      %s26 = sphi 0, %s24
      %s27 = sphi 0, %s25
      %s28 = sphi 0, %s26
      %s40 = sphi 0, %s42
      %s43 = sphi 0, %s40
      %s44 = sphi 0, %s43
      %s60 = sphi 0, %s44
      %s64 = sphi 0, %s64
      %s66 = sphi 0, %s64
      %s67 = sphi 0, %s66
      %s81 = sphi 0, %s67
      %s85 = sphi 0, %s85
      %s87 = sphi 0, %s85
      %s88 = sphi 0, %s87
      %s102 = sphi 0, %s88
      %s106 = sphi 0, %s106
      %s108 = sphi 0, %s106
      %s109 = sphi 0, %s108
      %s123 = sphi 0, %s109
      %s127 = sphi 0, %s127
      %s129 = sphi 0, %s127
      %s130 = sphi 0, %s129
      %s144 = sphi 0, %s130
      %s152 = sphi 0, %s154
      %s155 = sphi 0, %s152
      %s156 = sphi 0, %s155
      %s172 = sphi 0, %s156
    $region4: #{tpu_custom_call.1} parent=1 // loop_header_branch
      %19 = sbr.rel (%p17) target = $region8
    $region5: #{tpu_custom_call.1} parent=1 // loop_body
      %s21 = ssub.s32 %s16, 1
      %s22 = ssub.s32 %s16, 2
      %s29 = sadd.s32 1, %s24
      %p30 = scmp.ge.s32.totalorder %s29, 1
      %s31 = scalar_select %p30, 0, %s29
      %s32 = sadd.s32 1, %s23
      %s33 = scalar_select %p30, %s32, %s23
      %p34 = scmp.ge.s32.totalorder %s33, 2
      %s35 = scalar_select %p34, 0, %s33
      %s36 = ssub.s32 %s23, %s35
      %s37 = ssub.s32 %s24, %s31
      %s38 = sor.u32 %s36, %s37
      %p39 = scmp.eq.s32.totalorder %s38, 0
      %s41 = sadd.s32 %s40, 1
      %s42 = scalar_select %p39, %s40, %s41
      %p45 = pneg %p39
      %p46 = scmp.eq.s32.totalorder %s16, 1
      %p47 = por %p45, %p46
      %p48 = scmp.ne.s32.totalorder %s40, %s43
      %p49 = scmp.eq.s32.totalorder %s16, 0
      %p50 = por %p48, %p49
      %p51 = scmp.ne.s32.totalorder %s40, %s43
      %p52 = scmp.eq.s32.totalorder %s21, 1
      %p53 = por %p51, %p52
      %p54 = scmp.ne.s32.totalorder %s43, %s44
      %p55 = scmp.eq.s32.totalorder %s21, 0
      %p56 = por %p54, %p55
      %p57 = scmp.ne.s32.totalorder %s43, %s44
      %p58 = scmp.eq.s32.totalorder %s22, 1
      %p59 = por %p57, %p58
      %p61 = scmp.ne.s32.totalorder %s44, %s60
      %p62 = scmp.eq.s32.totalorder %s22, 0
      %p63 = por %p61, %p62
      %s65 = sadd.s32 %s64, 1
      %p68 = scmp.eq.s32.totalorder %s16, 1
      %p69 = scmp.ne.s32.totalorder %s64, %s66
      %p70 = scmp.eq.s32.totalorder %s16, 0
      %p71 = por %p69, %p70
      %p72 = scmp.ne.s32.totalorder %s64, %s66
      %p73 = scmp.eq.s32.totalorder %s21, 1
      %p74 = por %p72, %p73
      %p75 = scmp.ne.s32.totalorder %s66, %s67
      %p76 = scmp.eq.s32.totalorder %s21, 0
      %p77 = por %p75, %p76
      %p78 = scmp.ne.s32.totalorder %s66, %s67
      %p79 = scmp.eq.s32.totalorder %s22, 1
      %p80 = por %p78, %p79
      %p82 = scmp.ne.s32.totalorder %s67, %s81
      %p83 = scmp.eq.s32.totalorder %s22, 0
      %p84 = por %p82, %p83
      %s86 = sadd.s32 %s85, 1
      %p89 = scmp.eq.s32.totalorder %s16, 1
      %p90 = scmp.ne.s32.totalorder %s85, %s87
      %p91 = scmp.eq.s32.totalorder %s16, 0
      %p92 = por %p90, %p91
      %p93 = scmp.ne.s32.totalorder %s85, %s87
      %p94 = scmp.eq.s32.totalorder %s21, 1
      %p95 = por %p93, %p94
      %p96 = scmp.ne.s32.totalorder %s87, %s88
      %p97 = scmp.eq.s32.totalorder %s21, 0
      %p98 = por %p96, %p97
      %p99 = scmp.ne.s32.totalorder %s87, %s88
      %p100 = scmp.eq.s32.totalorder %s22, 1
      %p101 = por %p99, %p100
      %p103 = scmp.ne.s32.totalorder %s88, %s102
      %p104 = scmp.eq.s32.totalorder %s22, 0
      %p105 = por %p103, %p104
      %s107 = sadd.s32 %s106, 1
      %p110 = scmp.eq.s32.totalorder %s16, 1
      %p111 = scmp.ne.s32.totalorder %s106, %s108
      %p112 = scmp.eq.s32.totalorder %s16, 0
      %p113 = por %p111, %p112
      %p114 = scmp.ne.s32.totalorder %s106, %s108
      %p115 = scmp.eq.s32.totalorder %s21, 1
      %p116 = por %p114, %p115
      %p117 = scmp.ne.s32.totalorder %s108, %s109
      %p118 = scmp.eq.s32.totalorder %s21, 0
      %p119 = por %p117, %p118
      %p120 = scmp.ne.s32.totalorder %s108, %s109
      %p121 = scmp.eq.s32.totalorder %s22, 1
      %p122 = por %p120, %p121
      %p124 = scmp.ne.s32.totalorder %s109, %s123
      %p125 = scmp.eq.s32.totalorder %s22, 0
      %p126 = por %p124, %p125
      %s128 = sadd.s32 %s127, 1
      %p131 = scmp.eq.s32.totalorder %s16, 1
      %p132 = scmp.ne.s32.totalorder %s127, %s129
      %p133 = scmp.eq.s32.totalorder %s16, 0
      %p134 = por %p132, %p133
      %p135 = scmp.ne.s32.totalorder %s127, %s129
      %p136 = scmp.eq.s32.totalorder %s21, 1
      %p137 = por %p135, %p136
      %p138 = scmp.ne.s32.totalorder %s129, %s130
      %p139 = scmp.eq.s32.totalorder %s21, 0
      %p140 = por %p138, %p139
      %p141 = scmp.ne.s32.totalorder %s129, %s130
      %p142 = scmp.eq.s32.totalorder %s22, 1
      %p143 = por %p141, %p142
      %p145 = scmp.ne.s32.totalorder %s130, %s144
      %p146 = scmp.eq.s32.totalorder %s22, 0
      %p147 = por %p145, %p146
      %s148 = ssub.s32 %s23, %s35
      %s149 = ssub.s32 %s24, %s31
      %s150 = sor.u32 %s148, %s149
      %p151 = scmp.eq.s32.totalorder %s150, 0
      %s153 = sadd.s32 %s152, 1
      %s154 = scalar_select %p151, %s152, %s153
      %p157 = pneg %p151
      %p158 = scmp.eq.s32.totalorder %s16, 1
      %p159 = por %p157, %p158
      %p160 = scmp.ne.s32.totalorder %s152, %s155
      %p161 = scmp.eq.s32.totalorder %s16, 0
      %p162 = por %p160, %p161
      %p163 = scmp.ne.s32.totalorder %s152, %s155
      %p164 = scmp.eq.s32.totalorder %s21, 1
      %p165 = por %p163, %p164
      %p166 = scmp.ne.s32.totalorder %s155, %s156
      %p167 = scmp.eq.s32.totalorder %s21, 0
      %p168 = por %p166, %p167
      %p169 = scmp.ne.s32.totalorder %s155, %s156
      %p170 = scmp.eq.s32.totalorder %s22, 1
      %p171 = por %p169, %p170
      %p173 = scmp.ne.s32.totalorder %s156, %s172
      %p174 = scmp.eq.s32.totalorder %s22, 0
      %p175 = por %p173, %p174
      %p176 = scmp.le.s32.totalorder 1, %s16
      %p177 = scmp.lt.s32.totalorder %s16, 3
      %p178 = pnand %p176, %p177
      %p179 = pneg %p178
      // Predicated region
      $region9: #{tpu_custom_call.1} parent=5 // pred_check
        _
      $region10: #{tpu_custom_call.1} parent=5 // pred_check_branch
        %181 = sbr.rel (%p178) target = $region12
      $region11: #{tpu_custom_call.1} parent=5 // pred_region
        %s182 = ssub.s32 %s16, 1
        // Predicated region
        $region13: #{tpu_custom_call.1} parent=11 // pred_check
          %p183 = pneg %p77
        $region14: #{tpu_custom_call.1} parent=11 // pred_check_branch
          %185 = sbr.rel (%p183) target = $region16
        $region15: #{tpu_custom_call.1} parent=11 // pred_region
          %s187 = ssub.s32 512, 512
          %188 = vsyncadd [#allocation3], %s187
          %s189 = sshll.u32 [#allocation2], 4
          %s190 = int_to_ptr.vmem [resolvable:$true] %s189
          %195 = dma.hbm_to_vmem [thread:$0]  %s1, 512, %s190, [#allocation3], 128, 128, 8
        $region16: #{tpu_custom_call.1} parent=11 // pred_fallthru
          _
        // Predicated region
        $region17: #{tpu_custom_call.1} parent=11 // pred_check
          %p196 = pneg %p98
        $region18: #{tpu_custom_call.1} parent=11 // pred_check_branch
          %198 = sbr.rel (%p196) target = $region20
        $region19: #{tpu_custom_call.1} parent=11 // pred_region
          _
        $region20: #{tpu_custom_call.1} parent=11 // pred_fallthru
          _
        // Predicated region
        $region21: #{tpu_custom_call.1} parent=11 // pred_check
          %p199 = pneg %p119
        $region22: #{tpu_custom_call.1} parent=11 // pred_check_branch
          %201 = sbr.rel (%p199) target = $region24
        $region23: #{tpu_custom_call.1} parent=11 // pred_region
          %s203 = ssub.s32 512, 512
          %204 = vsyncadd [#allocation6], %s203
          %s205 = sshll.u32 [#allocation5], 4
          %s206 = int_to_ptr.vmem [resolvable:$true] %s205
          %211 = dma.hbm_to_vmem [thread:$0]  %s3, 512, %s206, [#allocation6], 128, 128, 8
        $region24: #{tpu_custom_call.1} parent=11 // pred_fallthru
          _
        // Predicated region
        $region25: #{tpu_custom_call.1} parent=11 // pred_check
          %p212 = pneg %p140
        $region26: #{tpu_custom_call.1} parent=11 // pred_check_branch
          %214 = sbr.rel (%p212) target = $region28
        $region27: #{tpu_custom_call.1} parent=11 // pred_region
          _
        $region28: #{tpu_custom_call.1} parent=11 // pred_fallthru
          _
      $region12: #{tpu_custom_call.1} parent=5 // pred_fallthru
        _
      %p215 = scmp.lt.s32.totalorder %s16, 2
      // Predicated region
      $region29: #{tpu_custom_call.1} parent=5 // pred_check
        %p216 = pneg %p215
      $region30: #{tpu_custom_call.1} parent=5 // pred_check_branch
        %218 = sbr.rel (%p216) target = $region32
      $region31: #{tpu_custom_call.1} parent=5 // pred_region
        // Predicated region
        $region33: #{tpu_custom_call.1} parent=31 // pred_check
          %p219 = pneg %p50
        $region34: #{tpu_custom_call.1} parent=31 // pred_check_branch
          %221 = sbr.rel (%p219) target = $region36
        $region35: #{tpu_custom_call.1} parent=31 // pred_region
          %p222 = scmp.lt.s32.totalorder %s23, 1
          %s223 = scalar_select %p222, %s23, 1
          %p224 = scmp.lt.s32.totalorder %s24, 0
          %s225 = scalar_select %p224, %s24, 0
          %s226 = smul.addr %s223, 4
          %s227 = sadd.s32 %s225, %s226
          %s228 = smul.addr %s227, 8
          %s229 = scalar_lea.vmem %s0, %s228
        $region36: #{tpu_custom_call.1} parent=31 // pred_fallthru
          _
      $region32: #{tpu_custom_call.1} parent=5 // pred_fallthru
        _
      %p230 = scmp.le.s32.totalorder 1, %s16
      %p231 = scmp.lt.s32.totalorder %s16, 3
      %p232 = pnand %p230, %p231
      %p233 = pneg %p232
      // Predicated region
      $region37: #{tpu_custom_call.1} parent=5 // pred_check
        _
      $region38: #{tpu_custom_call.1} parent=5 // pred_check_branch
        %235 = sbr.rel (%p232) target = $region40
      $region39: #{tpu_custom_call.1} parent=5 // pred_region
        %s236 = ssub.s32 %s16, 1
        // Predicated region
        $region41: #{tpu_custom_call.1} parent=39 // pred_check
          %p237 = pneg %p77
        $region42: #{tpu_custom_call.1} parent=39 // pred_check_branch
          %239 = sbr.rel (%p237) target = $region44
        $region43: #{tpu_custom_call.1} parent=39 // pred_region
          %240 = dma.done [#allocation3], 512
        $region44: #{tpu_custom_call.1} parent=39 // pred_fallthru
          _
        // Predicated region
        $region45: #{tpu_custom_call.1} parent=39 // pred_check
          %p241 = pneg %p119
        $region46: #{tpu_custom_call.1} parent=39 // pred_check_branch
          %243 = sbr.rel (%p241) target = $region48
        $region47: #{tpu_custom_call.1} parent=39 // pred_region
          %244 = dma.done [#allocation6], 512
        $region48: #{tpu_custom_call.1} parent=39 // pred_fallthru
          _
        %p245 = scmp.lt.s32.totalorder %s25, 1
        %s246 = scalar_select %p245, %s25, 1
        %p247 = scmp.lt.s32.totalorder %s26, 0
        %s248 = scalar_select %p247, %s26, 0
        %s249 = smul.addr %s246, 4
        %s250 = sadd.s32 %s248, %s249
        %s251 = smul.addr %s250, 8
        %s252 = scalar_lea.vmem %s0, %s251
        %p253 = pneg %p56
        %p254 = pneg %p53
        %p255 = pneg %p77
        %p256 = pneg %p74
        %p257 = pneg %p98
        %p258 = pneg %p95
        %p259 = pneg %p119
        %p260 = pneg %p116
        %p261 = pneg %p140
        %p262 = pneg %p137
        %p263 = pneg %p168
        %p264 = pneg %p165
        %s265 = sand.u32 %s155, 1
        %s266 = scalar_lea.sflag [#allocation4], %s265
        %s267 = sand.u32 %s155, 1
        %s268 = smul.addr %s267, 32
        %s269 = scalar_lea.vmem [#allocation7], %s268
        %p270 = scmp.lt.s32.totalorder %s25, 1
        %s271 = scalar_select %p270, %s25, 1
        %p272 = scmp.lt.s32.totalorder %s26, 0
        %s273 = scalar_select %p272, %s26, 0
        %s274 = smul.addr %s271, 4
        %s275 = sadd.s32 %s273, %s274
        %s276 = smul.addr %s275, 8
        %s277 = scalar_lea.vmem %s0, %s276
        %v278 = vld [vmem:[%s277] sm:$0xff]
        %v279 = vld [vmem:[%s277 + $0x8] sm:$0xff]
        %v280 = vld [vmem:[%s277 + $0x10] sm:$0xff]
        %v281 = vld [vmem:[%s277 + $0x18] sm:$0xff]
        %v282 = vld [vmem:[#allocation2] sm:$0xff]
        %v283 = vld [vmem:[#allocation2 + $0x8] sm:$0xff]
        %v284 = vld [vmem:[#allocation2 + $0x10] sm:$0xff]
        %v285 = vld [vmem:[#allocation2 + $0x18] sm:$0xff]
        %v286 = vld [vmem:[%s2] sm:$0xff]
        %v287 = vld [vmem:[%s2 + $0x8] sm:$0xff]
        %v288 = vld [vmem:[%s2 + $0x10] sm:$0xff]
        %v289 = vld [vmem:[%s2 + $0x18] sm:$0xff]
        %291 = vset.pattern.permute.xlu0 0
        %292 = vperm.xlu0 %291, %v286
        %v293 = vpop.permute.xlu0 %292
        %296 = vset.pattern.permute.xlu0 0
        %297 = vperm.xlu0 %296, %v287
        %v298 = vpop.permute.xlu0 %297
        %301 = vset.pattern.permute.xlu0 0
        %302 = vperm.xlu0 %301, %v288
        %v303 = vpop.permute.xlu0 %302
        %306 = vset.pattern.permute.xlu0 0
        %307 = vperm.xlu0 %306, %v289
        %v308 = vpop.permute.xlu0 %307
        %vm310 = vcmask 261120
        %v312 = vsel %vm310, %v282, 0
        %v315 = vsel %vm310, %v283, 0
        %v318 = vsel %vm310, %v284, 0
        %v321 = vsel %vm310, %v285, 0
        %323 = vmatprep.subr.mxu0 0.0
        %324 = vmatpush1.msra.mxu0 0.0
        %325 = vmatprep.subr.mxu0 0.0
        %326 = vmatpush1.msra.mxu0 0.0
        %327 = vmatprep.subr.mxu0 0.0
        %328 = vmatpush1.msra.mxu0 0.0
        %329 = vmatprep.subr.mxu0 0.0
        %330 = vmatpush1.msra.mxu0 0.0
        %331 = vmatprep.subr.mxu0 0.0
        %332 = vmatpush1.msra.mxu0 0.0
        %333 = vmatprep.subr.mxu0 0.0
        %334 = vmatpush1.msra.mxu0 0.0
        %335 = vmatprep.subr.mxu0 0.0
        %336 = vmatpush1.msra.mxu0 0.0
        %337 = vmatprep.subr.mxu0 0.0
        %338 = vmatpush1.msra.mxu0 0.0
        %339 = vmatprep.subr.mxu0 0.0
        %340 = vmatpush1.msra.mxu0 0.0
        %341 = vmatprep.subr.mxu0 0.0
        %342 = vmatpush1.msra.mxu0 0.0
        %343 = vmatprep.subr.mxu0 0.0
        %344 = vmatpush1.msra.mxu0 0.0
        %345 = vmatprep.subr.mxu0 0.0
        %346 = vmatpush1.msra.mxu0 0.0
        %347 = vmatprep.subr.mxu0 0.0
        %348 = vmatpush1.msra.mxu0 %v281
        %349 = vmatprep.subr.mxu0 0.0
        %350 = vmatpush1.msra.mxu0 %v280
        %351 = vmatprep.subr.mxu0 0.0
        %352 = vmatpush1.msra.mxu0 %v279
        %353 = vmatprep.subr.mxu0 0.0
        %354 = vmatpush1.msra.mxu0 %v278
        %355 = vmatprep.subr.mxu0 0.0
        %356 = vmatpush2.msra.mxu0 0.0
        %357 = vmatprep.subr.mxu0 0.0
        %358 = vmatpush2.msra.mxu0 0.0
        %359 = vmatprep.subr.mxu0 0.0
        %360 = vmatpush2.msra.mxu0 0.0
        %361 = vmatprep.subr.mxu0 0.0
        %362 = vmatpush2.msra.mxu0 0.0
        %363 = vmatprep.subr.mxu0 0.0
        %364 = vmatpush2.msra.mxu0 0.0
        %365 = vmatprep.subr.mxu0 0.0
        %366 = vmatpush2.msra.mxu0 0.0
        %367 = vmatprep.subr.mxu0 0.0
        %368 = vmatpush2.msra.mxu0 0.0
        %369 = vmatprep.subr.mxu0 0.0
        %370 = vmatpush2.msra.mxu0 0.0
        %371 = vmatprep.subr.mxu0 0.0
        %372 = vmatpush2.msra.mxu0 0.0
        %373 = vmatprep.subr.mxu0 0.0
        %374 = vmatpush2.msra.mxu0 0.0
        %375 = vmatprep.subr.mxu0 0.0
        %376 = vmatpush2.msra.mxu0 0.0
        %377 = vmatprep.subr.mxu0 0.0
        %378 = vmatpush2.msra.mxu0 0.0
        %379 = vmatprep.subr.mxu0 0.0
        %380 = vmatpush2.msra.mxu0 0.0
        %381 = vmatprep.subr.mxu0 0.0
        %382 = vmatpush2.msra.mxu0 0.0
        %383 = vmatprep.subr.mxu0 0.0
        %384 = vmatpush2.msra.mxu0 0.0
        %385 = vmatprep.subr.mxu0 0.0
        %386 = vmatpush2.msra.mxu0 0.0
        %387 = vmatprep.mubr.f32.mxu0 0.0
        %388 = vmatmul.mubr.f32.gmra.mxu0 %v312
        %v389 = vpop.f32.mrf.mxu0
        %v390 = vadd.f32 %v293, %v389
        %v391 = vpop.f32.mrf.mxu0
        %392 = vmatprep.mubr.f32.mxu0 0.0
        %393 = vmatmul.mubr.f32.gmra.mxu0 %v315
        %v394 = vpop.f32.mrf.mxu0
        %v395 = vadd.f32 %v298, %v394
        %v396 = vpop.f32.mrf.mxu0
        %397 = vmatprep.mubr.f32.mxu0 0.0
        %398 = vmatmul.mubr.f32.gmra.mxu0 %v318
        %v399 = vpop.f32.mrf.mxu0
        %v400 = vadd.f32 %v303, %v399
        %v401 = vpop.f32.mrf.mxu0
        %402 = vmatprep.mubr.f32.mxu0 0.0
        %403 = vmatmul.mubr.f32.gmra.mxu0 %v321
        %v404 = vpop.f32.mrf.mxu0
        %v405 = vadd.f32 %v308, %v404
        %v406 = vpop.f32.mrf.mxu0
        %407 = vdwg.mxu0
        %v408 = vmax.f32 %v390, 0.0
        %v409 = vmax.f32 %v395, 0.0
        %v410 = vmax.f32 %v400, 0.0
        %v411 = vmax.f32 %v405, 0.0
        %v412 = vld [vmem:[#allocation5] sm:$0xff]
        %v413 = vld [vmem:[#allocation5 + $0x8] sm:$0xff]
        %v414 = vld [vmem:[#allocation5 + $0x10] sm:$0xff]
        %v415 = vld [vmem:[#allocation5 + $0x18] sm:$0xff]
        %v416 = vld [vmem:[%s4] sm:$0xff]
        %v417 = vld [vmem:[%s4 + $0x8] sm:$0xff]
        %v418 = vld [vmem:[%s4 + $0x10] sm:$0xff]
        %v419 = vld [vmem:[%s4 + $0x18] sm:$0xff]
        %421 = vset.pattern.permute.xlu0 0
        %422 = vperm.xlu0 %421, %v416
        %v423 = vpop.permute.xlu0 %422
        %426 = vset.pattern.permute.xlu0 0
        %427 = vperm.xlu0 %426, %v417
        %v428 = vpop.permute.xlu0 %427
        %431 = vset.pattern.permute.xlu0 0
        %432 = vperm.xlu0 %431, %v418
        %v433 = vpop.permute.xlu0 %432
        %436 = vset.pattern.permute.xlu0 0
        %437 = vperm.xlu0 %436, %v419
        %v438 = vpop.permute.xlu0 %437
        %v441 = vsel %vm310, %v412, 0
        %v444 = vsel %vm310, %v413, 0
        %v447 = vsel %vm310, %v414, 0
        %v450 = vsel %vm310, %v415, 0
        %452 = vmatprep.subr.mxu0 0.0
        %453 = vmatpush1.msra.mxu0 0.0
        %454 = vmatprep.subr.mxu0 0.0
        %455 = vmatpush1.msra.mxu0 0.0
        %456 = vmatprep.subr.mxu0 0.0
        %457 = vmatpush1.msra.mxu0 0.0
        %458 = vmatprep.subr.mxu0 0.0
        %459 = vmatpush1.msra.mxu0 0.0
        %460 = vmatprep.subr.mxu0 0.0
        %461 = vmatpush1.msra.mxu0 0.0
        %462 = vmatprep.subr.mxu0 0.0
        %463 = vmatpush1.msra.mxu0 0.0
        %464 = vmatprep.subr.mxu0 0.0
        %465 = vmatpush1.msra.mxu0 0.0
        %466 = vmatprep.subr.mxu0 0.0
        %467 = vmatpush1.msra.mxu0 0.0
        %468 = vmatprep.subr.mxu0 0.0
        %469 = vmatpush1.msra.mxu0 0.0
        %470 = vmatprep.subr.mxu0 0.0
        %471 = vmatpush1.msra.mxu0 0.0
        %472 = vmatprep.subr.mxu0 0.0
        %473 = vmatpush1.msra.mxu0 0.0
        %474 = vmatprep.subr.mxu0 0.0
        %475 = vmatpush1.msra.mxu0 0.0
        %476 = vmatprep.subr.mxu0 0.0
        %477 = vmatpush1.msra.mxu0 %v411
        %478 = vmatprep.subr.mxu0 0.0
        %479 = vmatpush1.msra.mxu0 %v410
        %480 = vmatprep.subr.mxu0 0.0
        %481 = vmatpush1.msra.mxu0 %v409
        %482 = vmatprep.subr.mxu0 0.0
        %483 = vmatpush1.msra.mxu0 %v408
        %484 = vmatprep.subr.mxu0 0.0
        %485 = vmatpush2.msra.mxu0 0.0
        %486 = vmatprep.subr.mxu0 0.0
        %487 = vmatpush2.msra.mxu0 0.0
        %488 = vmatprep.subr.mxu0 0.0
        %489 = vmatpush2.msra.mxu0 0.0
        %490 = vmatprep.subr.mxu0 0.0
        %491 = vmatpush2.msra.mxu0 0.0
        %492 = vmatprep.subr.mxu0 0.0
        %493 = vmatpush2.msra.mxu0 0.0
        %494 = vmatprep.subr.mxu0 0.0
        %495 = vmatpush2.msra.mxu0 0.0
        %496 = vmatprep.subr.mxu0 0.0
        %497 = vmatpush2.msra.mxu0 0.0
        %498 = vmatprep.subr.mxu0 0.0
        %499 = vmatpush2.msra.mxu0 0.0
        %500 = vmatprep.subr.mxu0 0.0
        %501 = vmatpush2.msra.mxu0 0.0
        %502 = vmatprep.subr.mxu0 0.0
        %503 = vmatpush2.msra.mxu0 0.0
        %504 = vmatprep.subr.mxu0 0.0
        %505 = vmatpush2.msra.mxu0 0.0
        %506 = vmatprep.subr.mxu0 0.0
        %507 = vmatpush2.msra.mxu0 0.0
        %508 = vmatprep.subr.mxu0 0.0
        %509 = vmatpush2.msra.mxu0 0.0
        %510 = vmatprep.subr.mxu0 0.0
        %511 = vmatpush2.msra.mxu0 0.0
        %512 = vmatprep.subr.mxu0 0.0
        %513 = vmatpush2.msra.mxu0 0.0
        %514 = vmatprep.subr.mxu0 0.0
        %515 = vmatpush2.msra.mxu0 0.0
        %516 = vmatprep.mubr.f32.mxu0 0.0
        %517 = vmatmul.mubr.f32.gmra.mxu0 %v441
        %v518 = vpop.f32.mrf.mxu0
        %v519 = vadd.f32 %v423, %v518
        %v520 = vpop.f32.mrf.mxu0
        %521 = vmatprep.mubr.f32.mxu0 0.0
        %522 = vmatmul.mubr.f32.gmra.mxu0 %v444
        %v523 = vpop.f32.mrf.mxu0
        %v524 = vadd.f32 %v428, %v523
        %v525 = vpop.f32.mrf.mxu0
        %526 = vmatprep.mubr.f32.mxu0 0.0
        %527 = vmatmul.mubr.f32.gmra.mxu0 %v447
        %v528 = vpop.f32.mrf.mxu0
        %v529 = vadd.f32 %v433, %v528
        %v530 = vpop.f32.mrf.mxu0
        %531 = vmatprep.mubr.f32.mxu0 0.0
        %532 = vmatmul.mubr.f32.gmra.mxu0 %v450
        %v533 = vpop.f32.mrf.mxu0
        %v534 = vadd.f32 %v438, %v533
        %v535 = vpop.f32.mrf.mxu0
        %536 = vdwg.mxu0
        %v537 = vadd.f32 %v278, %v519
        %v538 = vadd.f32 %v279, %v524
        %v539 = vadd.f32 %v280, %v529
        %v540 = vadd.f32 %v281, %v534
        %v541 = vmax.f32 %v537, 0.0
        %v542 = vmax.f32 %v538, 0.0
        %v543 = vmax.f32 %v539, 0.0
        %v544 = vmax.f32 %v540, 0.0
        %vm545 = vcmask 523264
        %546 = vst.msk [vmem:[%s269] sm:$0xff] %vm545, %v541
        %547 = vst.msk [vmem:[%s269 + $0x8] sm:$0xff] %vm545, %v542
        %548 = vst.msk [vmem:[%s269 + $0x10] sm:$0xff] %vm545, %v543
        %549 = vst.msk [vmem:[%s269 + $0x18] sm:$0xff] %vm545, %v544
        %s550 = sand.u32 %s155, 1
        %s551 = scalar_lea.sflag [#allocation4], %s550
        %s552 = sand.u32 %s155, 1
        %s553 = smul.addr %s552, 32
        %s554 = scalar_lea.vmem [#allocation7], %s553
        // Predicated region
        $region49: #{tpu_custom_call.1} parent=39 // pred_check
          %p555 = pneg %p165
        $region50: #{tpu_custom_call.1} parent=39 // pred_check_branch
          %557 = sbr.rel (%p555) target = $region52
        $region51: #{tpu_custom_call.1} parent=39 // pred_region
          %s559 = ssub.s32 512, 512
          %560 = vsyncadd %s551, %s559
          %s561 = smul.addr %s25, 4
          %s562 = sadd.s32 %s26, %s561
          %s563 = smul.addr %s562, 128
          %s564 = scalar_lea.hbm %s5, %s563
          %s565 = sshll.u32 %s554, 4
          %s566 = int_to_ptr.vmem [resolvable:$true] %s565
          %571 = dma.vmem_to_hbm [thread:$0]  %s566, 512, %s564, %s551, 128, 128, 8
        $region52: #{tpu_custom_call.1} parent=39 // pred_fallthru
          _
      $region40: #{tpu_custom_call.1} parent=5 // pred_fallthru
        _
      %p572 = scmp.le.s32.totalorder 2, %s16
      // Predicated region
      $region53: #{tpu_custom_call.1} parent=5 // pred_check
        %p573 = pneg %p572
      $region54: #{tpu_custom_call.1} parent=5 // pred_check_branch
        %575 = sbr.rel (%p573) target = $region56
      $region55: #{tpu_custom_call.1} parent=5 // pred_region
        %s576 = ssub.s32 %s16, 2
        // Predicated region
        $region57: #{tpu_custom_call.1} parent=55 // pred_check
          %p577 = pneg %p171
        $region58: #{tpu_custom_call.1} parent=55 // pred_check_branch
          %579 = sbr.rel (%p577) target = $region60
        $region59: #{tpu_custom_call.1} parent=55 // pred_region
          %s580 = sand.u32 %s156, 1
          %s581 = scalar_lea.sflag [#allocation4], %s580
          %s582 = sand.u32 %s156, 1
          %s583 = smul.addr %s582, 32
          %s584 = scalar_lea.vmem [#allocation7], %s583
          %585 = dma.done %s581, 512
        $region60: #{tpu_custom_call.1} parent=55 // pred_fallthru
          _
      $region56: #{tpu_custom_call.1} parent=5 // pred_fallthru
        _
    $region6: #{tpu_custom_call.1} parent=1 // loop_footer
      %s20 = sadd.s32 1, %s16
    $region7: #{tpu_custom_call.1} parent=1 // loop_footer_branch
      %15 = sbr.rel target = $region3
    $region8: #{tpu_custom_call.1} parent=1 // loop_exit
      _
    %586 = vsyncpa [#allocation3], 1
    %s587 = scalar_lea.sflag [#allocation3], 1
    %588 = vsyncpa %s587, 1
    %589 = vsyncpa [#allocation6], 1
    %590 = vsyncpa [#allocation4], 1
    %s591 = scalar_lea.sflag [#allocation4], 1
    %592 = vsyncpa %s591, 1

</llo_original>
